<compile_context>
chip_gen: v5e
topology: v5e:2x2
jax: 0.10.0
libtpu: 0.0.40
codegen_flags: <defaults>
</compile_context>

<pallas_src>
import jax
import jax.numpy as jnp
from jax.experimental import pallas as pl
from jax.experimental.pallas import tpu as pltpu

N_CLASSES = 78
C_PAD = 128          # class dim padded to a full lane width
HIDDEN = 768
N_HEADS = 3


def _round_up(x, m):
    return ((x + m - 1) // m) * m


# ---------------------------------------------------------------------------
# Kernel: out = sum_k (emb_k @ (scal_k * W_k)) + b_fused   (f32 accumulation)
# ---------------------------------------------------------------------------
def krel_kernel(tar_ref, rel_ref, sub_ref,   # VMEM (tm, 768)       f32 embeddings
                w_ref,                       # VMEM (3, 768, 128)   bf16 scaled weights
                b_ref,                       # VMEM (1, 128)        f32 fused bias
                out_ref):                    # VMEM (tm, 128)       f32
    # dropout (eval mode) == identity
    acc = jnp.dot(tar_ref[...].astype(jnp.bfloat16), w_ref[0],
                  preferred_element_type=jnp.float32)
    acc = acc + jnp.dot(rel_ref[...].astype(jnp.bfloat16), w_ref[1],
                        preferred_element_type=jnp.float32)
    acc = acc + jnp.dot(sub_ref[...].astype(jnp.bfloat16), w_ref[2],
                        preferred_element_type=jnp.float32)
    out_ref[...] = acc + b_ref[...]


# ---------------------------------------------------------------------------
# One-time parameter preparation (fold scalars, stack heads, pad, cast).
# ---------------------------------------------------------------------------
def prepare_params(params):
    w0, w1, w2 = params["scal"][0], params["scal"][1], params["scal"][2]
    # Fold scalars into weights/bias (valid: dropout is identity, heads linear).
    w_stack = jnp.stack(
        [w0 * params["wt"], w1 * params["wr"], w2 * params["ws"]], axis=0)  # (3, 768, 78)
    b_fused = w0 * params["bt"] + w1 * params["br"] + w2 * params["bs"]     # (78,)
    # Pad classes 78 -> 128 for lane-dense stores; cast weights to bf16.
    w_stack = jnp.pad(w_stack, ((0, 0), (0, 0), (0, C_PAD - N_CLASSES)))
    b_fused = jnp.pad(b_fused, (0, C_PAD - N_CLASSES))
    return {
        "w": w_stack.astype(jnp.bfloat16),                  # (3, 768, 128) bf16
        "b": b_fused.reshape(1, C_PAD).astype(jnp.float32)  # (1, 128)      f32
    }


# ---------------------------------------------------------------------------
# Wrapper
# ---------------------------------------------------------------------------
def krel_forward(tar, rel, sub, prepped, *, block_b=256):
    """res = w0*(tar@Wt+bt) + w1*(rel@Wr+br) + w2*(sub@Ws+bs), eval-mode dropout."""
    B = tar.shape[0]
    tm = min(block_b, _round_up(B, 8))
    Bp = _round_up(B, tm)
    if Bp != B:
        pad = ((0, Bp - B), (0, 0))
        tar = jnp.pad(tar, pad)
        rel = jnp.pad(rel, pad)
        sub = jnp.pad(sub, pad)

    grid = (Bp // tm,)
    emb_spec = pl.BlockSpec((tm, HIDDEN), lambda i: (i, 0))

    out = pl.pallas_call(
        krel_kernel,
        out_shape=jax.ShapeDtypeStruct((Bp, C_PAD), jnp.float32),
        grid=grid,
        in_specs=[emb_spec, emb_spec, emb_spec,
                  pl.BlockSpec((N_HEADS, HIDDEN, C_PAD), lambda i: (0, 0, 0)),
                  pl.BlockSpec((1, C_PAD), lambda i: (0, 0))],
        out_specs=pl.BlockSpec((tm, C_PAD), lambda i: (i, 0)),
        compiler_params=pltpu.CompilerParams(
            dimension_semantics=("parallel",)),
        cost_estimate=pl.CostEstimate(
            flops=2 * Bp * N_HEADS * HIDDEN * C_PAD,
            transcendentals=0,
            bytes_accessed=(3 * Bp * HIDDEN * 4            # embeddings (f32)
                            + N_HEADS * HIDDEN * C_PAD * 2 # scaled weights (bf16)
                            + C_PAD * 4                    # bias
                            + Bp * C_PAD * 4)),            # output
    )(tar, rel, sub, prepped["w"], prepped["b"])

    return out[:B, :N_CLASSES]


# ---------------------------------------------------------------------------
# Param init (torch.nn.Linear layout transposed -> [768, n_classes]) & reference
# ---------------------------------------------------------------------------
def init_params(key):
    ks = jax.random.split(key, 7)

    def lin_w(k):
        return jax.random.normal(k, (HIDDEN, N_CLASSES), jnp.float32) * 0.02

    def lin_b(k):
        return jax.random.normal(k, (N_CLASSES,), jnp.float32) * 0.02

    return {
        "wt": lin_w(ks[0]), "bt": lin_b(ks[1]),
        "wr": lin_w(ks[2]), "br": lin_b(ks[3]),
        "ws": lin_w(ks[4]), "bs": lin_b(ks[5]),
        # torch.nn.ParameterList of 3 scalars: randn(1) each
        "scal": jax.random.normal(ks[6], (3,), jnp.float32),
    }


def krel_reference(tar, rel, sub, p):
    out_tar = tar @ p["wt"] + p["bt"]
    out_rel = rel @ p["wr"] + p["br"]
    out_sub = sub @ p["ws"] + p["bs"]
    return p["scal"][0] * out_tar + p["scal"][1] * out_rel + p["scal"][2] * out_sub


if __name__ == "__main__":
    key = jax.random.PRNGKey(0)
    kp, k1, k2, k3 = jax.random.split(key, 4)
    params = init_params(kp)
    prepped = prepare_params(params)        # one-time: fold / stack / pad / cast

    B = 8  # small batch of pooled BERT embeddings (stand-ins for encode())
    tar = jax.random.normal(k1, (B, HIDDEN), jnp.float32)
    rel = jax.random.normal(k2, (B, HIDDEN), jnp.float32)
    sub = jax.random.normal(k3, (B, HIDDEN), jnp.float32)

    out = krel_forward(tar, rel, sub, prepped)
    out = jax.block_until_ready(out)

    ref = krel_reference(tar, rel, sub, params)
    assert out.shape == (B, N_CLASSES)
    # bf16 matmul operands with f32 accumulation vs f32 reference.
    assert jnp.allclose(out, ref, atol=3e-2, rtol=3e-2), "mismatch vs JAX reference"

    print("KERNEL_OK")
</pallas_src>

<mosaic_0001>
module attributes {stable_mosaic.version = 11 : i64} {
  func.func @krel_kernel(%arg0: i32, %arg1: memref<8x768xf32, #tpu.memory_space<vmem>>, %arg2: memref<8x768xf32, #tpu.memory_space<vmem>>, %arg3: memref<8x768xf32, #tpu.memory_space<vmem>>, %arg4: memref<3x768x128xbf16, #tpu.memory_space<vmem>>, %arg5: memref<1x128xf32, #tpu.memory_space<vmem>>, %arg6: memref<8x128xf32, #tpu.memory_space<vmem>>) attributes {dimension_semantics = [#tpu.dimension_semantics<parallel>], iteration_bounds = array<i64: 1>, scalar_prefetch = 0 : i64, scratch_operands = 0 : i64, tpu.core_type = #tpu.core_type<tc>, window_params = [{transform_indices = @transform_0, window_bounds = array<i64: 8, 768>}, {transform_indices = @transform_1, window_bounds = array<i64: 8, 768>}, {transform_indices = @transform_2, window_bounds = array<i64: 8, 768>}, {pipeline_mode = #tpu.pipeline_mode<synchronous>, transform_indices = @transform_3, window_bounds = array<i64: 3, 768, 128>}, {pipeline_mode = #tpu.pipeline_mode<synchronous>, transform_indices = @transform_4, window_bounds = array<i64: 1, 128>}, {transform_indices = @transform_5, window_bounds = array<i64: 8, 128>}]} {
    %c0 = arith.constant 0 : index
    %c0_0 = arith.constant 0 : index
    %0 = vector.load %arg1[%c0, %c0_0] : memref<8x768xf32, #tpu.memory_space<vmem>>, vector<8x768xf32>
    %1 = arith.truncf %0 : vector<8x768xf32> to vector<8x768xbf16>
    %c0_1 = arith.constant 0 : index
    %c0_2 = arith.constant 0 : index
    %c0_3 = arith.constant 0 : index
    %2 = vector.load %arg4[%c0_1, %c0_2, %c0_3] : memref<3x768x128xbf16, #tpu.memory_space<vmem>>, vector<1x768x128xbf16>
    %3 = vector.shape_cast %2 : vector<1x768x128xbf16> to vector<768x128xbf16>
    %cst = arith.constant dense<0.000000e+00> : vector<8x128xf32>
    %4 = tpu.matmul %1, %3, %cst {dimension_numbers = #tpu.dot_dimension_numbers<[1], [0], [0], [1], [0, 0, 1, 1], [], []>} : vector<8x768xbf16>, vector<768x128xbf16>, vector<8x128xf32> -> vector<8x128xf32>
    %c0_4 = arith.constant 0 : index
    %c0_5 = arith.constant 0 : index
    %5 = vector.load %arg2[%c0_4, %c0_5] : memref<8x768xf32, #tpu.memory_space<vmem>>, vector<8x768xf32>
    %6 = arith.truncf %5 : vector<8x768xf32> to vector<8x768xbf16>
    %c1 = arith.constant 1 : index
    %c0_6 = arith.constant 0 : index
    %c0_7 = arith.constant 0 : index
    %7 = vector.load %arg4[%c1, %c0_6, %c0_7] : memref<3x768x128xbf16, #tpu.memory_space<vmem>>, vector<1x768x128xbf16>
    %8 = vector.shape_cast %7 : vector<1x768x128xbf16> to vector<768x128xbf16>
    %cst_8 = arith.constant dense<0.000000e+00> : vector<8x128xf32>
    %9 = tpu.matmul %6, %8, %cst_8 {dimension_numbers = #tpu.dot_dimension_numbers<[1], [0], [0], [1], [0, 0, 1, 1], [], []>} : vector<8x768xbf16>, vector<768x128xbf16>, vector<8x128xf32> -> vector<8x128xf32>
    %10 = arith.addf %4, %9 : vector<8x128xf32>
    %c0_9 = arith.constant 0 : index
    %c0_10 = arith.constant 0 : index
    %11 = vector.load %arg3[%c0_9, %c0_10] : memref<8x768xf32, #tpu.memory_space<vmem>>, vector<8x768xf32>
    %12 = arith.truncf %11 : vector<8x768xf32> to vector<8x768xbf16>
    %c2 = arith.constant 2 : index
    %c0_11 = arith.constant 0 : index
    %c0_12 = arith.constant 0 : index
    %13 = vector.load %arg4[%c2, %c0_11, %c0_12] : memref<3x768x128xbf16, #tpu.memory_space<vmem>>, vector<1x768x128xbf16>
    %14 = vector.shape_cast %13 : vector<1x768x128xbf16> to vector<768x128xbf16>
    %cst_13 = arith.constant dense<0.000000e+00> : vector<8x128xf32>
    %15 = tpu.matmul %12, %14, %cst_13 {dimension_numbers = #tpu.dot_dimension_numbers<[1], [0], [0], [1], [0, 0, 1, 1], [], []>} : vector<8x768xbf16>, vector<768x128xbf16>, vector<8x128xf32> -> vector<8x128xf32>
    %16 = arith.addf %10, %15 : vector<8x128xf32>
    %c0_14 = arith.constant 0 : index
    %c0_15 = arith.constant 0 : index
    %17 = vector.load %arg5[%c0_14, %c0_15] : memref<1x128xf32, #tpu.memory_space<vmem>>, vector<1x128xf32>
    %18 = vector.broadcast %17 : vector<1x128xf32> to vector<8x128xf32>
    %19 = arith.addf %16, %18 : vector<8x128xf32>
    %c0_16 = arith.constant 0 : index
    %c0_17 = arith.constant 0 : index
    %20 = vector.load %arg6[%c0_16, %c0_17] : memref<8x128xf32, #tpu.memory_space<vmem>>, vector<8x128xf32>
    tpu.vector_store %arg6[%c0_16, %c0_17], %19 {strides = array<i32>} : memref<8x128xf32, #tpu.memory_space<vmem>>, vector<8x128xf32>,
    return
  }
  func.func @transform_0(%arg0: i32) -> (i32, i32) {
    %c0_i32 = arith.constant 0 : i32
    %c0_i32_0 = arith.constant 0 : i32
    return %arg0, %c0_i32 : i32, i32
  }
  func.func @transform_1(%arg0: i32) -> (i32, i32) {
    %c0_i32 = arith.constant 0 : i32
    %c0_i32_0 = arith.constant 0 : i32
    return %arg0, %c0_i32 : i32, i32
  }
  func.func @transform_2(%arg0: i32) -> (i32, i32) {
    %c0_i32 = arith.constant 0 : i32
    %c0_i32_0 = arith.constant 0 : i32
    return %arg0, %c0_i32 : i32, i32
  }
  func.func @transform_3(%arg0: i32) -> (i32, i32, i32) {
    %c0_i32 = arith.constant 0 : i32
    %c0_i32_0 = arith.constant 0 : i32
    %c0_i32_1 = arith.constant 0 : i32
    %c0_i32_2 = arith.constant 0 : i32
    return %c0_i32, %c0_i32_0, %c0_i32_1 : i32, i32, i32
  }
  func.func @transform_4(%arg0: i32) -> (i32, i32) {
    %c0_i32 = arith.constant 0 : i32
    %c0_i32_0 = arith.constant 0 : i32
    %c0_i32_1 = arith.constant 0 : i32
    return %c0_i32, %c0_i32_0 : i32, i32
  }
  func.func @transform_5(%arg0: i32) -> (i32, i32) {
    %c0_i32 = arith.constant 0 : i32
    %c0_i32_0 = arith.constant 0 : i32
    return %arg0, %c0_i32 : i32, i32
  }
}

</mosaic_0001>

<llo_original>
// kernel: tpu_custom_call.1
$region0: #{tpu_custom_call.1}
  #allocation0 [shape = 'u32[]', space=smem, size = 0x4, offset = 0x4, fixed_abs, tag = 'smem constant byte address 0x4 - core index']
  #allocation1 [shape = 'u32[72,128]{1,0:T(1,128)}', space=vmem, size = 0x9000, scoped, tag = 'internal scratch']
  %s0 = inlined_call_operand.hbm [shape: f32[8,768], index: 0, kind: input, shape index: {}]
  %s1 = inlined_call_operand.hbm [shape: f32[8,768], index: 1, kind: input, shape index: {}]
  %s2 = inlined_call_operand.hbm [shape: f32[8,768], index: 2, kind: input, shape index: {}]
  %s3 = inlined_call_operand.hbm [shape: bf16[3,768,128], index: 3, kind: input, shape index: {}]
  %s4 = inlined_call_operand.vmem [shape: f32[1,128], index: 4, kind: input, shape index: {}]
  %s5 = inlined_call_operand.hbm [shape: f32[8,128], index: 5, kind: output, shape index: {}]
  %s6 = sld [smem:[#allocation0]]
  $region46: #{tpu_custom_call.1} parent=0
    _
  %s8 = ssub.s32 1, %s6
  %s9 = scalar_select 0, %s8, %s6
  $region1: #{tpu_custom_call.1} parent=0
    #allocation2 [shape = 'u8[24576]{0}', space=vmem, size = 0x6000, scoped, tag = 'input window, operand 0, single buffered']
    #allocation3 [shape = 's32[1]{0}', space=sflag, size = 0x4, scoped, tag = 'scoped memory for tpu_custom_call.1']
    #allocation4 [shape = 's32[1]{0}', space=sflag, size = 0x4, scoped, tag = 'scoped memory for tpu_custom_call.1']
    #allocation5 [shape = 'u8[24576]{0}', space=vmem, size = 0x6000, scoped, tag = 'input window, operand 1, single buffered']
    #allocation6 [shape = 's32[1]{0}', space=sflag, size = 0x4, scoped, tag = 'scoped memory for tpu_custom_call.1']
    #allocation7 [shape = 'u8[24576]{0}', space=vmem, size = 0x6000, scoped, tag = 'input window, operand 2, single buffered']
    #allocation8 [shape = 'u8[589824]{0}', space=vmem, size = 0x90000, scoped, tag = 'input window, operand 3, single buffered']
    #allocation9 [shape = 's32[1]{0}', space=sflag, size = 0x4, scoped, tag = 'scoped memory for tpu_custom_call.1']
    #allocation10 [shape = 'u8[4096]{0}', space=vmem, size = 0x1000, scoped, tag = 'output window, operand 0, single buffered']
    %10 = vsyncpa [#allocation3], 0
    %11 = vsyncpa [#allocation6], 0
    %12 = vsyncpa [#allocation9], 0
    %13 = vsyncpa [#allocation4], 0
    // Predicated region
    $region2: #{tpu_custom_call.1} parent=1 // pred_check
      _
    $region3: #{tpu_custom_call.1} parent=1 // pred_check_branch
      %15 = sbr.rel (0) target = $region5
    $region4: #{tpu_custom_call.1} parent=1 // pred_region
      %17 = vsyncadd [#allocation3], 0
      %s19 = sshll.u32 %s0, 4
      %s20 = int_to_ptr.hbm [resolvable:$true] %s19
      %s21 = sshll.u32 [#allocation2], 4
      %s22 = int_to_ptr.vmem [resolvable:$true] %s21
      %24 = dma.hbm_to_vmem [thread:$0]  %s20, 768, %s22, [#allocation3]
    $region5: #{tpu_custom_call.1} parent=1 // pred_fallthru
      _
    // Predicated region
    $region6: #{tpu_custom_call.1} parent=1 // pred_check
      _
    $region7: #{tpu_custom_call.1} parent=1 // pred_check_branch
      %26 = sbr.rel (0) target = $region9
    $region8: #{tpu_custom_call.1} parent=1 // pred_region
      %28 = vsyncadd [#allocation6], 0
      %s30 = sshll.u32 %s1, 4
      %s31 = int_to_ptr.hbm [resolvable:$true] %s30
      %s32 = sshll.u32 [#allocation5], 4
      %s33 = int_to_ptr.vmem [resolvable:$true] %s32
      %35 = dma.hbm_to_vmem [thread:$0]  %s31, 768, %s33, [#allocation6]
    $region9: #{tpu_custom_call.1} parent=1 // pred_fallthru
      _
    // Predicated region
    $region10: #{tpu_custom_call.1} parent=1 // pred_check
      _
    $region11: #{tpu_custom_call.1} parent=1 // pred_check_branch
      %37 = sbr.rel (0) target = $region13
    $region12: #{tpu_custom_call.1} parent=1 // pred_region
      %39 = vsyncadd [#allocation6], 0
      %s41 = sshll.u32 %s2, 4
      %s42 = int_to_ptr.hbm [resolvable:$true] %s41
      %s43 = sshll.u32 [#allocation7], 4
      %s44 = int_to_ptr.vmem [resolvable:$true] %s43
      %46 = dma.hbm_to_vmem [thread:$0]  %s42, 768, %s44, [#allocation6]
    $region13: #{tpu_custom_call.1} parent=1 // pred_fallthru
      _
    // Predicated region
    $region14: #{tpu_custom_call.1} parent=1 // pred_check
      _
    $region15: #{tpu_custom_call.1} parent=1 // pred_check_branch
      %48 = sbr.rel (0) target = $region17
    $region16: #{tpu_custom_call.1} parent=1 // pred_region
      %50 = vsyncadd [#allocation9], 0
      %s51 = sshll.u32 %s3, 4
      %s52 = int_to_ptr.hbm [resolvable:$true] %s51
      %s53 = sshll.u32 [#allocation8], 4
      %s54 = int_to_ptr.vmem [resolvable:$true] %s53
      %59 = dma.hbm_to_vmem [thread:$0]  %s52, 18432, %s54, [#allocation9], 64, 64, 4
    $region17: #{tpu_custom_call.1} parent=1 // pred_fallthru
      _
    // Predicated region
    $region18: #{tpu_custom_call.1} parent=1 // pred_check
      _
    $region19: #{tpu_custom_call.1} parent=1 // pred_check_branch
      %61 = sbr.rel (0) target = $region21
    $region20: #{tpu_custom_call.1} parent=1 // pred_region
      _
    $region21: #{tpu_custom_call.1} parent=1 // pred_fallthru
      _
    // Predicated region
    $region22: #{tpu_custom_call.1} parent=1 // pred_check
      _
    $region23: #{tpu_custom_call.1} parent=1 // pred_check_branch
      %63 = sbr.rel (0) target = $region25
    $region24: #{tpu_custom_call.1} parent=1 // pred_region
      %65 = dma.done [#allocation3], 768
    $region25: #{tpu_custom_call.1} parent=1 // pred_fallthru
      _
    // Predicated region
    $region26: #{tpu_custom_call.1} parent=1 // pred_check
      _
    $region27: #{tpu_custom_call.1} parent=1 // pred_check_branch
      %67 = sbr.rel (0) target = $region29
    $region28: #{tpu_custom_call.1} parent=1 // pred_region
      %69 = dma.done [#allocation6], 768
    $region29: #{tpu_custom_call.1} parent=1 // pred_fallthru
      _
    // Predicated region
    $region30: #{tpu_custom_call.1} parent=1 // pred_check
      _
    $region31: #{tpu_custom_call.1} parent=1 // pred_check_branch
      %71 = sbr.rel (0) target = $region33
    $region32: #{tpu_custom_call.1} parent=1 // pred_region
      %73 = dma.done [#allocation6], 768
    $region33: #{tpu_custom_call.1} parent=1 // pred_fallthru
      _
    // Predicated region
    $region34: #{tpu_custom_call.1} parent=1 // pred_check
      _
    $region35: #{tpu_custom_call.1} parent=1 // pred_check_branch
      %75 = sbr.rel (0) target = $region37
    $region36: #{tpu_custom_call.1} parent=1 // pred_region
      %77 = dma.done [#allocation9], 18432
    $region37: #{tpu_custom_call.1} parent=1 // pred_fallthru
      _
    %v78 = vld [vmem:[#allocation2] sm:$0xff]
    %v79 = vld [vmem:[#allocation2 + $0x8] sm:$0xff]
    %v80 = vld [vmem:[#allocation2 + $0x10] sm:$0xff]
    %v81 = vld [vmem:[#allocation2 + $0x18] sm:$0xff]
    %v82 = vld [vmem:[#allocation2 + $0x20] sm:$0xff]
    %v83 = vld [vmem:[#allocation2 + $0x28] sm:$0xff]
    %v84 = vpack.c.bf16 %v78, %v78
    %v85 = vpack.c.bf16 %v79, %v79
    %v86 = vpack.c.bf16 %v80, %v80
    %v87 = vpack.c.bf16 %v81, %v81
    %v88 = vpack.c.bf16 %v82, %v82
    %v89 = vpack.c.bf16 %v83, %v83
    %v90 = vld [vmem:[#allocation8] sm:$0xf]
    %v91 = vld [vmem:[#allocation8 + $0x4] sm:$0xf]
    %v92 = vld [vmem:[#allocation8 + $0x8] sm:$0xf]
    %v93 = vld [vmem:[#allocation8 + $0xc] sm:$0xf]
    %v94 = vld [vmem:[#allocation8 + $0x10] sm:$0xf]
    %v95 = vld [vmem:[#allocation8 + $0x14] sm:$0xf]
    %v96 = vld [vmem:[#allocation8 + $0x18] sm:$0xf]
    %v97 = vld [vmem:[#allocation8 + $0x1c] sm:$0xf]
    %v98 = vld [vmem:[#allocation8 + $0x20] sm:$0xf]
    %v99 = vld [vmem:[#allocation8 + $0x24] sm:$0xf]
    %v100 = vld [vmem:[#allocation8 + $0x28] sm:$0xf]
    %v101 = vld [vmem:[#allocation8 + $0x2c] sm:$0xf]
    %v102 = vld [vmem:[#allocation8 + $0x30] sm:$0xf]
    %v103 = vld [vmem:[#allocation8 + $0x34] sm:$0xf]
    %v104 = vld [vmem:[#allocation8 + $0x38] sm:$0xf]
    %v105 = vld [vmem:[#allocation8 + $0x3c] sm:$0xf]
    %v106 = vld [vmem:[#allocation8 + $0x40] sm:$0xf]
    %v107 = vld [vmem:[#allocation8 + $0x44] sm:$0xf]
    %v108 = vld [vmem:[#allocation8 + $0x48] sm:$0xf]
    %v109 = vld [vmem:[#allocation8 + $0x4c] sm:$0xf]
    %v110 = vld [vmem:[#allocation8 + $0x50] sm:$0xf]
    %v111 = vld [vmem:[#allocation8 + $0x54] sm:$0xf]
    %v112 = vld [vmem:[#allocation8 + $0x58] sm:$0xf]
    %v113 = vld [vmem:[#allocation8 + $0x5c] sm:$0xf]
    %v114 = vld [vmem:[#allocation8 + $0x60] sm:$0xf]
    %v115 = vld [vmem:[#allocation8 + $0x64] sm:$0xf]
    %v116 = vld [vmem:[#allocation8 + $0x68] sm:$0xf]
    %v117 = vld [vmem:[#allocation8 + $0x6c] sm:$0xf]
    %v118 = vld [vmem:[#allocation8 + $0x70] sm:$0xf]
    %v119 = vld [vmem:[#allocation8 + $0x74] sm:$0xf]
    %v120 = vld [vmem:[#allocation8 + $0x78] sm:$0xf]
    %v121 = vld [vmem:[#allocation8 + $0x7c] sm:$0xf]
    %v122 = vld [vmem:[#allocation8 + $0x80] sm:$0xf]
    %v123 = vld [vmem:[#allocation8 + $0x84] sm:$0xf]
    %v124 = vld [vmem:[#allocation8 + $0x88] sm:$0xf]
    %v125 = vld [vmem:[#allocation8 + $0x8c] sm:$0xf]
    %v126 = vld [vmem:[#allocation8 + $0x90] sm:$0xf]
    %v127 = vld [vmem:[#allocation8 + $0x94] sm:$0xf]
    %v128 = vld [vmem:[#allocation8 + $0x98] sm:$0xf]
    %v129 = vld [vmem:[#allocation8 + $0x9c] sm:$0xf]
    %v130 = vld [vmem:[#allocation8 + $0xa0] sm:$0xf]
    %v131 = vld [vmem:[#allocation8 + $0xa4] sm:$0xf]
    %v132 = vld [vmem:[#allocation8 + $0xa8] sm:$0xf]
    %v133 = vld [vmem:[#allocation8 + $0xac] sm:$0xf]
    %v134 = vld [vmem:[#allocation8 + $0xb0] sm:$0xf]
    %v135 = vld [vmem:[#allocation8 + $0xb4] sm:$0xf]
    %v136 = vld [vmem:[#allocation8 + $0xb8] sm:$0xf]
    %v137 = vld [vmem:[#allocation8 + $0xbc] sm:$0xf]
    %v138 = vld [vmem:[#allocation8 + $0xc0] sm:$0xf]
    %v139 = vld [vmem:[#allocation8 + $0xc4] sm:$0xf]
    %v140 = vld [vmem:[#allocation8 + $0xc8] sm:$0xf]
    %v141 = vld [vmem:[#allocation8 + $0xcc] sm:$0xf]
    %v142 = vld [vmem:[#allocation8 + $0xd0] sm:$0xf]
    %v143 = vld [vmem:[#allocation8 + $0xd4] sm:$0xf]
    %v144 = vld [vmem:[#allocation8 + $0xd8] sm:$0xf]
    %v145 = vld [vmem:[#allocation8 + $0xdc] sm:$0xf]
    %v146 = vld [vmem:[#allocation8 + $0xe0] sm:$0xf]
    %v147 = vld [vmem:[#allocation8 + $0xe4] sm:$0xf]
    %v148 = vld [vmem:[#allocation8 + $0xe8] sm:$0xf]
    %v149 = vld [vmem:[#allocation8 + $0xec] sm:$0xf]
    %v150 = vld [vmem:[#allocation8 + $0xf0] sm:$0xf]
    %v151 = vld [vmem:[#allocation8 + $0xf4] sm:$0xf]
    %v152 = vld [vmem:[#allocation8 + $0xf8] sm:$0xf]
    %v153 = vld [vmem:[#allocation8 + $0xfc] sm:$0xf]
    %v154 = vld [vmem:[#allocation8 + $0x100] sm:$0xf]
    %v155 = vld [vmem:[#allocation8 + $0x104] sm:$0xf]
    %v156 = vld [vmem:[#allocation8 + $0x108] sm:$0xf]
    %v157 = vld [vmem:[#allocation8 + $0x10c] sm:$0xf]
    %v158 = vld [vmem:[#allocation8 + $0x110] sm:$0xf]
    %v159 = vld [vmem:[#allocation8 + $0x114] sm:$0xf]
    %v160 = vld [vmem:[#allocation8 + $0x118] sm:$0xf]
    %v161 = vld [vmem:[#allocation8 + $0x11c] sm:$0xf]
    %v162 = vld [vmem:[#allocation8 + $0x120] sm:$0xf]
    %v163 = vld [vmem:[#allocation8 + $0x124] sm:$0xf]
    %v164 = vld [vmem:[#allocation8 + $0x128] sm:$0xf]
    %v165 = vld [vmem:[#allocation8 + $0x12c] sm:$0xf]
    %v166 = vld [vmem:[#allocation8 + $0x130] sm:$0xf]
    %v167 = vld [vmem:[#allocation8 + $0x134] sm:$0xf]
    %v168 = vld [vmem:[#allocation8 + $0x138] sm:$0xf]
    %v169 = vld [vmem:[#allocation8 + $0x13c] sm:$0xf]
    %v170 = vld [vmem:[#allocation8 + $0x140] sm:$0xf]
    %v171 = vld [vmem:[#allocation8 + $0x144] sm:$0xf]
    %v172 = vld [vmem:[#allocation8 + $0x148] sm:$0xf]
    %v173 = vld [vmem:[#allocation8 + $0x14c] sm:$0xf]
    %v174 = vld [vmem:[#allocation8 + $0x150] sm:$0xf]
    %v175 = vld [vmem:[#allocation8 + $0x154] sm:$0xf]
    %v176 = vld [vmem:[#allocation8 + $0x158] sm:$0xf]
    %v177 = vld [vmem:[#allocation8 + $0x15c] sm:$0xf]
    %v178 = vld [vmem:[#allocation8 + $0x160] sm:$0xf]
    %v179 = vld [vmem:[#allocation8 + $0x164] sm:$0xf]
    %v180 = vld [vmem:[#allocation8 + $0x168] sm:$0xf]
    %v181 = vld [vmem:[#allocation8 + $0x16c] sm:$0xf]
    %v182 = vld [vmem:[#allocation8 + $0x170] sm:$0xf]
    %v183 = vld [vmem:[#allocation8 + $0x174] sm:$0xf]
    %v184 = vld [vmem:[#allocation8 + $0x178] sm:$0xf]
    %v185 = vld [vmem:[#allocation8 + $0x17c] sm:$0xf]
    %v186 = vld [vmem:[#allocation5] sm:$0xff]
    %v187 = vld [vmem:[#allocation5 + $0x8] sm:$0xff]
    %v188 = vld [vmem:[#allocation5 + $0x10] sm:$0xff]
    %v189 = vld [vmem:[#allocation5 + $0x18] sm:$0xff]
    %v190 = vld [vmem:[#allocation5 + $0x20] sm:$0xff]
    %v191 = vld [vmem:[#allocation5 + $0x28] sm:$0xff]
    %v192 = vpack.c.bf16 %v186, %v186
    %v193 = vpack.c.bf16 %v187, %v187
    %v194 = vpack.c.bf16 %v188, %v188
    %v195 = vpack.c.bf16 %v189, %v189
    %v196 = vpack.c.bf16 %v190, %v190
    %v197 = vpack.c.bf16 %v191, %v191
    %s198 = scalar_lea.vmem [#allocation8], 384
    %v199 = vld [vmem:[%s198] sm:$0xf]
    %v200 = vld [vmem:[%s198 + $0x4] sm:$0xf]
    %v201 = vld [vmem:[%s198 + $0x8] sm:$0xf]
    %v202 = vld [vmem:[%s198 + $0xc] sm:$0xf]
    %v203 = vld [vmem:[%s198 + $0x10] sm:$0xf]
    %v204 = vld [vmem:[%s198 + $0x14] sm:$0xf]
    %v205 = vld [vmem:[%s198 + $0x18] sm:$0xf]
    %v206 = vld [vmem:[%s198 + $0x1c] sm:$0xf]
    %v207 = vld [vmem:[%s198 + $0x20] sm:$0xf]
    %v208 = vld [vmem:[%s198 + $0x24] sm:$0xf]
    %v209 = vld [vmem:[%s198 + $0x28] sm:$0xf]
    %v210 = vld [vmem:[%s198 + $0x2c] sm:$0xf]
    %v211 = vld [vmem:[%s198 + $0x30] sm:$0xf]
    %v212 = vld [vmem:[%s198 + $0x34] sm:$0xf]
    %v213 = vld [vmem:[%s198 + $0x38] sm:$0xf]
    %v214 = vld [vmem:[%s198 + $0x3c] sm:$0xf]
    %v215 = vld [vmem:[%s198 + $0x40] sm:$0xf]
    %v216 = vld [vmem:[%s198 + $0x44] sm:$0xf]
    %v217 = vld [vmem:[%s198 + $0x48] sm:$0xf]
    %v218 = vld [vmem:[%s198 + $0x4c] sm:$0xf]
    %v219 = vld [vmem:[%s198 + $0x50] sm:$0xf]
    %v220 = vld [vmem:[%s198 + $0x54] sm:$0xf]
    %v221 = vld [vmem:[%s198 + $0x58] sm:$0xf]
    %v222 = vld [vmem:[%s198 + $0x5c] sm:$0xf]
    %v223 = vld [vmem:[%s198 + $0x60] sm:$0xf]
    %v224 = vld [vmem:[%s198 + $0x64] sm:$0xf]
    %v225 = vld [vmem:[%s198 + $0x68] sm:$0xf]
    %v226 = vld [vmem:[%s198 + $0x6c] sm:$0xf]
    %v227 = vld [vmem:[%s198 + $0x70] sm:$0xf]
    %v228 = vld [vmem:[%s198 + $0x74] sm:$0xf]
    %v229 = vld [vmem:[%s198 + $0x78] sm:$0xf]
    %v230 = vld [vmem:[%s198 + $0x7c] sm:$0xf]
    %v231 = vld [vmem:[%s198 + $0x80] sm:$0xf]
    %v232 = vld [vmem:[%s198 + $0x84] sm:$0xf]
    %v233 = vld [vmem:[%s198 + $0x88] sm:$0xf]
    %v234 = vld [vmem:[%s198 + $0x8c] sm:$0xf]
    %v235 = vld [vmem:[%s198 + $0x90] sm:$0xf]
    %v236 = vld [vmem:[%s198 + $0x94] sm:$0xf]
    %v237 = vld [vmem:[%s198 + $0x98] sm:$0xf]
    %v238 = vld [vmem:[%s198 + $0x9c] sm:$0xf]
    %v239 = vld [vmem:[%s198 + $0xa0] sm:$0xf]
    %v240 = vld [vmem:[%s198 + $0xa4] sm:$0xf]
    %v241 = vld [vmem:[%s198 + $0xa8] sm:$0xf]
    %v242 = vld [vmem:[%s198 + $0xac] sm:$0xf]
    %v243 = vld [vmem:[%s198 + $0xb0] sm:$0xf]
    %v244 = vld [vmem:[%s198 + $0xb4] sm:$0xf]
    %v245 = vld [vmem:[%s198 + $0xb8] sm:$0xf]
    %v246 = vld [vmem:[%s198 + $0xbc] sm:$0xf]
    %v247 = vld [vmem:[%s198 + $0xc0] sm:$0xf]
    %v248 = vld [vmem:[%s198 + $0xc4] sm:$0xf]
    %v249 = vld [vmem:[%s198 + $0xc8] sm:$0xf]
    %v250 = vld [vmem:[%s198 + $0xcc] sm:$0xf]
    %v251 = vld [vmem:[%s198 + $0xd0] sm:$0xf]
    %v252 = vld [vmem:[%s198 + $0xd4] sm:$0xf]
    %v253 = vld [vmem:[%s198 + $0xd8] sm:$0xf]
    %v254 = vld [vmem:[%s198 + $0xdc] sm:$0xf]
    %v255 = vld [vmem:[%s198 + $0xe0] sm:$0xf]
    %v256 = vld [vmem:[%s198 + $0xe4] sm:$0xf]
    %v257 = vld [vmem:[%s198 + $0xe8] sm:$0xf]
    %v258 = vld [vmem:[%s198 + $0xec] sm:$0xf]
    %v259 = vld [vmem:[%s198 + $0xf0] sm:$0xf]
    %v260 = vld [vmem:[%s198 + $0xf4] sm:$0xf]
    %v261 = vld [vmem:[%s198 + $0xf8] sm:$0xf]
    %v262 = vld [vmem:[%s198 + $0xfc] sm:$0xf]
    %v263 = vld [vmem:[%s198 + $0x100] sm:$0xf]
    %v264 = vld [vmem:[%s198 + $0x104] sm:$0xf]
    %v265 = vld [vmem:[%s198 + $0x108] sm:$0xf]
    %v266 = vld [vmem:[%s198 + $0x10c] sm:$0xf]
    %v267 = vld [vmem:[%s198 + $0x110] sm:$0xf]
    %v268 = vld [vmem:[%s198 + $0x114] sm:$0xf]
    %v269 = vld [vmem:[%s198 + $0x118] sm:$0xf]
    %v270 = vld [vmem:[%s198 + $0x11c] sm:$0xf]
    %v271 = vld [vmem:[%s198 + $0x120] sm:$0xf]
    %v272 = vld [vmem:[%s198 + $0x124] sm:$0xf]
    %v273 = vld [vmem:[%s198 + $0x128] sm:$0xf]
    %v274 = vld [vmem:[%s198 + $0x12c] sm:$0xf]
    %v275 = vld [vmem:[%s198 + $0x130] sm:$0xf]
    %v276 = vld [vmem:[%s198 + $0x134] sm:$0xf]
    %v277 = vld [vmem:[%s198 + $0x138] sm:$0xf]
    %v278 = vld [vmem:[%s198 + $0x13c] sm:$0xf]
    %v279 = vld [vmem:[%s198 + $0x140] sm:$0xf]
    %v280 = vld [vmem:[%s198 + $0x144] sm:$0xf]
    %v281 = vld [vmem:[%s198 + $0x148] sm:$0xf]
    %v282 = vld [vmem:[%s198 + $0x14c] sm:$0xf]
    %v283 = vld [vmem:[%s198 + $0x150] sm:$0xf]
    %v284 = vld [vmem:[%s198 + $0x154] sm:$0xf]
    %v285 = vld [vmem:[%s198 + $0x158] sm:$0xf]
    %v286 = vld [vmem:[%s198 + $0x15c] sm:$0xf]
    %v287 = vld [vmem:[%s198 + $0x160] sm:$0xf]
    %v288 = vld [vmem:[%s198 + $0x164] sm:$0xf]
    %v289 = vld [vmem:[%s198 + $0x168] sm:$0xf]
    %v290 = vld [vmem:[%s198 + $0x16c] sm:$0xf]
    %v291 = vld [vmem:[%s198 + $0x170] sm:$0xf]
    %v292 = vld [vmem:[%s198 + $0x174] sm:$0xf]
    %v293 = vld [vmem:[%s198 + $0x178] sm:$0xf]
    %v294 = vld [vmem:[%s198 + $0x17c] sm:$0xf]
    %v391 = vunpack.c.l.b16 %v199
    %v392 = vunpack.c.l.b16 %v200
    %v393 = vunpack.c.l.b16 %v201
    %v394 = vunpack.c.l.b16 %v202
    %v395 = vunpack.c.l.b16 %v203
    %v396 = vunpack.c.l.b16 %v204
    %v397 = vunpack.c.l.b16 %v205
    %v398 = vunpack.c.l.b16 %v206
    %v399 = vunpack.c.l.b16 %v207
    %v400 = vunpack.c.l.b16 %v208
    %v401 = vunpack.c.l.b16 %v209
    %v402 = vunpack.c.l.b16 %v210
    %v403 = vunpack.c.l.b16 %v211
    %v404 = vunpack.c.l.b16 %v212
    %v405 = vunpack.c.l.b16 %v213
    %v406 = vunpack.c.l.b16 %v214
    %v407 = vunpack.c.l.b16 %v215
    %v408 = vunpack.c.l.b16 %v216
    %v409 = vunpack.c.l.b16 %v217
    %v410 = vunpack.c.l.b16 %v218
    %v411 = vunpack.c.l.b16 %v219
    %v412 = vunpack.c.l.b16 %v220
    %v413 = vunpack.c.l.b16 %v221
    %v414 = vunpack.c.l.b16 %v222
    %v415 = vunpack.c.l.b16 %v223
    %v416 = vunpack.c.l.b16 %v224
    %v417 = vunpack.c.l.b16 %v225
    %v418 = vunpack.c.l.b16 %v226
    %v419 = vunpack.c.l.b16 %v227
    %v420 = vunpack.c.l.b16 %v228
    %v421 = vunpack.c.l.b16 %v229
    %v422 = vunpack.c.l.b16 %v230
    %v423 = vunpack.c.l.b16 %v231
    %v424 = vunpack.c.l.b16 %v232
    %v425 = vunpack.c.l.b16 %v233
    %v426 = vunpack.c.l.b16 %v234
    %v427 = vunpack.c.l.b16 %v235
    %v428 = vunpack.c.l.b16 %v236
    %v429 = vunpack.c.l.b16 %v237
    %v430 = vunpack.c.l.b16 %v238
    %v431 = vunpack.c.l.b16 %v239
    %v432 = vunpack.c.l.b16 %v240
    %v433 = vunpack.c.l.b16 %v241
    %v434 = vunpack.c.l.b16 %v242
    %v435 = vunpack.c.l.b16 %v243
    %v436 = vunpack.c.l.b16 %v244
    %v437 = vunpack.c.l.b16 %v245
    %v438 = vunpack.c.l.b16 %v246
    %v439 = vunpack.c.l.b16 %v247
    %v440 = vunpack.c.l.b16 %v248
    %v441 = vunpack.c.l.b16 %v249
    %v442 = vunpack.c.l.b16 %v250
    %v443 = vunpack.c.l.b16 %v251
    %v444 = vunpack.c.l.b16 %v252
    %v445 = vunpack.c.l.b16 %v253
    %v446 = vunpack.c.l.b16 %v254
    %v447 = vunpack.c.l.b16 %v255
    %v448 = vunpack.c.l.b16 %v256
    %v449 = vunpack.c.l.b16 %v257
    %v450 = vunpack.c.l.b16 %v258
    %v451 = vunpack.c.l.b16 %v259
    %v452 = vunpack.c.l.b16 %v260
    %v453 = vunpack.c.l.b16 %v261
    %v454 = vunpack.c.l.b16 %v262
    %v455 = vunpack.c.l.b16 %v263
    %v456 = vunpack.c.l.b16 %v264
    %v457 = vunpack.c.l.b16 %v265
    %v458 = vunpack.c.l.b16 %v266
    %v459 = vunpack.c.l.b16 %v267
    %v460 = vunpack.c.l.b16 %v268
    %v461 = vunpack.c.l.b16 %v269
    %v462 = vunpack.c.l.b16 %v270
    %v463 = vunpack.c.l.b16 %v271
    %v464 = vunpack.c.l.b16 %v272
    %v465 = vunpack.c.l.b16 %v273
    %v466 = vunpack.c.l.b16 %v274
    %v467 = vunpack.c.l.b16 %v275
    %v468 = vunpack.c.l.b16 %v276
    %v469 = vunpack.c.l.b16 %v277
    %v470 = vunpack.c.l.b16 %v278
    %v471 = vunpack.c.l.b16 %v279
    %v472 = vunpack.c.l.b16 %v280
    %v473 = vunpack.c.l.b16 %v281
    %v474 = vunpack.c.l.b16 %v282
    %v475 = vunpack.c.l.b16 %v283
    %v476 = vunpack.c.l.b16 %v284
    %v477 = vunpack.c.l.b16 %v285
    %v478 = vunpack.c.l.b16 %v286
    %v479 = vunpack.c.l.b16 %v287
    %v480 = vunpack.c.l.b16 %v288
    %v481 = vunpack.c.l.b16 %v289
    %v482 = vunpack.c.l.b16 %v290
    %v483 = vunpack.c.l.b16 %v291
    %v484 = vunpack.c.l.b16 %v292
    %v485 = vunpack.c.l.b16 %v293
    %v486 = vunpack.c.l.b16 %v294
    %v487 = vpack.c.b16 %v392, %v391
    %v488 = vpack.c.b16 %v394, %v393
    %v489 = vpack.c.b16 %v396, %v395
    %v490 = vpack.c.b16 %v398, %v397
    %v491 = vpack.c.b16 %v400, %v399
    %v492 = vpack.c.b16 %v402, %v401
    %v493 = vpack.c.b16 %v404, %v403
    %v494 = vpack.c.b16 %v406, %v405
    %v495 = vpack.c.b16 %v408, %v407
    %v496 = vpack.c.b16 %v410, %v409
    %v497 = vpack.c.b16 %v412, %v411
    %v498 = vpack.c.b16 %v414, %v413
    %v499 = vpack.c.b16 %v416, %v415
    %v500 = vpack.c.b16 %v418, %v417
    %v501 = vpack.c.b16 %v420, %v419
    %v502 = vpack.c.b16 %v422, %v421
    %v503 = vpack.c.b16 %v424, %v423
    %v504 = vpack.c.b16 %v426, %v425
    %v505 = vpack.c.b16 %v428, %v427
    %v506 = vpack.c.b16 %v430, %v429
    %v507 = vpack.c.b16 %v432, %v431
    %v508 = vpack.c.b16 %v434, %v433
    %v509 = vpack.c.b16 %v436, %v435
    %v510 = vpack.c.b16 %v438, %v437
    %v511 = vpack.c.b16 %v440, %v439
    %v512 = vpack.c.b16 %v442, %v441
    %v513 = vpack.c.b16 %v444, %v443
    %v514 = vpack.c.b16 %v446, %v445
    %v515 = vpack.c.b16 %v448, %v447
    %v516 = vpack.c.b16 %v450, %v449
    %v517 = vpack.c.b16 %v452, %v451
    %v518 = vpack.c.b16 %v454, %v453
    %v519 = vpack.c.b16 %v456, %v455
    %v520 = vpack.c.b16 %v458, %v457
    %v521 = vpack.c.b16 %v460, %v459
    %v522 = vpack.c.b16 %v462, %v461
    %v523 = vpack.c.b16 %v464, %v463
    %v524 = vpack.c.b16 %v466, %v465
    %v525 = vpack.c.b16 %v468, %v467
    %v526 = vpack.c.b16 %v470, %v469
    %v527 = vpack.c.b16 %v472, %v471
    %v528 = vpack.c.b16 %v474, %v473
    %v529 = vpack.c.b16 %v476, %v475
    %v530 = vpack.c.b16 %v478, %v477
    %v531 = vpack.c.b16 %v480, %v479
    %v532 = vpack.c.b16 %v482, %v481
    %v533 = vpack.c.b16 %v484, %v483
    %v534 = vpack.c.b16 %v486, %v485
    %583 = vmatpush.bf16.msra.mxu0 %v494
    %584 = vmatpush.bf16.msra.mxu0 %v493
    %585 = vmatpush.bf16.msra.mxu0 %v492
    %586 = vmatpush.bf16.msra.mxu0 %v491
    %587 = vmatpush.bf16.msra.mxu0 %v490
    %588 = vmatpush.bf16.msra.mxu0 %v489
    %589 = vmatpush.bf16.msra.mxu0 %v488
    %590 = vmatpush.bf16.msra.mxu0 %v487
    %591 = vmatmul.bf16.gmra.mxu0 %v192
    %v592 = vpop.f32.mrf.mxu0
    %v593 = vadd.f32 0.0, %v592
    %v594 = vpop.f32.mrf.mxu0
    %595 = vdwg.mxu0
    %596 = vmatpush.bf16.msra.mxu0 %v502
    %597 = vmatpush.bf16.msra.mxu0 %v501
    %598 = vmatpush.bf16.msra.mxu0 %v500
    %599 = vmatpush.bf16.msra.mxu0 %v499
    %600 = vmatpush.bf16.msra.mxu0 %v498
    %601 = vmatpush.bf16.msra.mxu0 %v497
    %602 = vmatpush.bf16.msra.mxu0 %v496
    %603 = vmatpush.bf16.msra.mxu0 %v495
    %604 = vmatmul.bf16.gmra.mxu0 %v193
    %v605 = vpop.f32.mrf.mxu0
    %v606 = vadd.f32 %v593, %v605
    %v607 = vpop.f32.mrf.mxu0
    %608 = vdwg.mxu0
    %609 = vmatpush.bf16.msra.mxu0 %v510
    %610 = vmatpush.bf16.msra.mxu0 %v509
    %611 = vmatpush.bf16.msra.mxu0 %v508
    %612 = vmatpush.bf16.msra.mxu0 %v507
    %613 = vmatpush.bf16.msra.mxu0 %v506
    %614 = vmatpush.bf16.msra.mxu0 %v505
    %615 = vmatpush.bf16.msra.mxu0 %v504
    %616 = vmatpush.bf16.msra.mxu0 %v503
    %617 = vmatmul.bf16.gmra.mxu0 %v194
    %v618 = vpop.f32.mrf.mxu0
    %v619 = vadd.f32 %v606, %v618
    %v620 = vpop.f32.mrf.mxu0
    %621 = vdwg.mxu0
    %622 = vmatpush.bf16.msra.mxu0 %v518
    %623 = vmatpush.bf16.msra.mxu0 %v517
    %624 = vmatpush.bf16.msra.mxu0 %v516
    %625 = vmatpush.bf16.msra.mxu0 %v515
    %626 = vmatpush.bf16.msra.mxu0 %v514
    %627 = vmatpush.bf16.msra.mxu0 %v513
    %628 = vmatpush.bf16.msra.mxu0 %v512
    %629 = vmatpush.bf16.msra.mxu0 %v511
    %630 = vmatmul.bf16.gmra.mxu0 %v195
    %v631 = vpop.f32.mrf.mxu0
    %v632 = vadd.f32 %v619, %v631
    %v633 = vpop.f32.mrf.mxu0
    %634 = vdwg.mxu0
    %635 = vmatpush.bf16.msra.mxu0 %v526
    %636 = vmatpush.bf16.msra.mxu0 %v525
    %637 = vmatpush.bf16.msra.mxu0 %v524
    %638 = vmatpush.bf16.msra.mxu0 %v523
    %639 = vmatpush.bf16.msra.mxu0 %v522
    %640 = vmatpush.bf16.msra.mxu0 %v521
    %641 = vmatpush.bf16.msra.mxu0 %v520
    %642 = vmatpush.bf16.msra.mxu0 %v519
    %643 = vmatmul.bf16.gmra.mxu0 %v196
    %v644 = vpop.f32.mrf.mxu0
    %v645 = vadd.f32 %v632, %v644
    %v646 = vpop.f32.mrf.mxu0
    %647 = vdwg.mxu0
    %648 = vmatpush.bf16.msra.mxu0 %v534
    %649 = vmatpush.bf16.msra.mxu0 %v533
    %650 = vmatpush.bf16.msra.mxu0 %v532
    %651 = vmatpush.bf16.msra.mxu0 %v531
    %652 = vmatpush.bf16.msra.mxu0 %v530
    %653 = vmatpush.bf16.msra.mxu0 %v529
    %654 = vmatpush.bf16.msra.mxu0 %v528
    %655 = vmatpush.bf16.msra.mxu0 %v527
    %656 = vmatmul.bf16.gmra.mxu0 %v197
    %v657 = vpop.f32.mrf.mxu0
    %v658 = vadd.f32 %v645, %v657
    %v659 = vpop.f32.mrf.mxu0
    %660 = vdwg.mxu0
    %v757 = vunpack.c.l.b16 %v90
    %v758 = vunpack.c.l.b16 %v91
    %v759 = vunpack.c.l.b16 %v92
    %v760 = vunpack.c.l.b16 %v93
    %v761 = vunpack.c.l.b16 %v94
    %v762 = vunpack.c.l.b16 %v95
    %v763 = vunpack.c.l.b16 %v96
    %v764 = vunpack.c.l.b16 %v97
    %v765 = vunpack.c.l.b16 %v98
    %v766 = vunpack.c.l.b16 %v99
    %v767 = vunpack.c.l.b16 %v100
    %v768 = vunpack.c.l.b16 %v101
    %v769 = vunpack.c.l.b16 %v102
    %v770 = vunpack.c.l.b16 %v103
    %v771 = vunpack.c.l.b16 %v104
    %v772 = vunpack.c.l.b16 %v105
    %v773 = vunpack.c.l.b16 %v106
    %v774 = vunpack.c.l.b16 %v107
    %v775 = vunpack.c.l.b16 %v108
    %v776 = vunpack.c.l.b16 %v109
    %v777 = vunpack.c.l.b16 %v110
    %v778 = vunpack.c.l.b16 %v111
    %v779 = vunpack.c.l.b16 %v112
    %v780 = vunpack.c.l.b16 %v113
    %v781 = vunpack.c.l.b16 %v114
    %v782 = vunpack.c.l.b16 %v115
    %v783 = vunpack.c.l.b16 %v116
    %v784 = vunpack.c.l.b16 %v117
    %v785 = vunpack.c.l.b16 %v118
    %v786 = vunpack.c.l.b16 %v119
    %v787 = vunpack.c.l.b16 %v120
    %v788 = vunpack.c.l.b16 %v121
    %v789 = vunpack.c.l.b16 %v122
    %v790 = vunpack.c.l.b16 %v123
    %v791 = vunpack.c.l.b16 %v124
    %v792 = vunpack.c.l.b16 %v125
    %v793 = vunpack.c.l.b16 %v126
    %v794 = vunpack.c.l.b16 %v127
    %v795 = vunpack.c.l.b16 %v128
    %v796 = vunpack.c.l.b16 %v129
    %v797 = vunpack.c.l.b16 %v130
    %v798 = vunpack.c.l.b16 %v131
    %v799 = vunpack.c.l.b16 %v132
    %v800 = vunpack.c.l.b16 %v133
    %v801 = vunpack.c.l.b16 %v134
    %v802 = vunpack.c.l.b16 %v135
    %v803 = vunpack.c.l.b16 %v136
    %v804 = vunpack.c.l.b16 %v137
    %v805 = vunpack.c.l.b16 %v138
    %v806 = vunpack.c.l.b16 %v139
    %v807 = vunpack.c.l.b16 %v140
    %v808 = vunpack.c.l.b16 %v141
    %v809 = vunpack.c.l.b16 %v142
    %v810 = vunpack.c.l.b16 %v143
    %v811 = vunpack.c.l.b16 %v144
    %v812 = vunpack.c.l.b16 %v145
    %v813 = vunpack.c.l.b16 %v146
    %v814 = vunpack.c.l.b16 %v147
    %v815 = vunpack.c.l.b16 %v148
    %v816 = vunpack.c.l.b16 %v149
    %v817 = vunpack.c.l.b16 %v150
    %v818 = vunpack.c.l.b16 %v151
    %v819 = vunpack.c.l.b16 %v152
    %v820 = vunpack.c.l.b16 %v153
    %v821 = vunpack.c.l.b16 %v154
    %v822 = vunpack.c.l.b16 %v155
    %v823 = vunpack.c.l.b16 %v156
    %v824 = vunpack.c.l.b16 %v157
    %v825 = vunpack.c.l.b16 %v158
    %v826 = vunpack.c.l.b16 %v159
    %v827 = vunpack.c.l.b16 %v160
    %v828 = vunpack.c.l.b16 %v161
    %v829 = vunpack.c.l.b16 %v162
    %v830 = vunpack.c.l.b16 %v163
    %v831 = vunpack.c.l.b16 %v164
    %v832 = vunpack.c.l.b16 %v165
    %v833 = vunpack.c.l.b16 %v166
    %v834 = vunpack.c.l.b16 %v167
    %v835 = vunpack.c.l.b16 %v168
    %v836 = vunpack.c.l.b16 %v169
    %v837 = vunpack.c.l.b16 %v170
    %v838 = vunpack.c.l.b16 %v171
    %v839 = vunpack.c.l.b16 %v172
    %v840 = vunpack.c.l.b16 %v173
    %v841 = vunpack.c.l.b16 %v174
    %v842 = vunpack.c.l.b16 %v175
    %v843 = vunpack.c.l.b16 %v176
    %v844 = vunpack.c.l.b16 %v177
    %v845 = vunpack.c.l.b16 %v178
    %v846 = vunpack.c.l.b16 %v179
    %v847 = vunpack.c.l.b16 %v180
    %v848 = vunpack.c.l.b16 %v181
    %v849 = vunpack.c.l.b16 %v182
    %v850 = vunpack.c.l.b16 %v183
    %v851 = vunpack.c.l.b16 %v184
    %v852 = vunpack.c.l.b16 %v185
    %v853 = vpack.c.b16 %v758, %v757
    %v854 = vpack.c.b16 %v760, %v759
    %v855 = vpack.c.b16 %v762, %v761
    %v856 = vpack.c.b16 %v764, %v763
    %v857 = vpack.c.b16 %v766, %v765
    %v858 = vpack.c.b16 %v768, %v767
    %v859 = vpack.c.b16 %v770, %v769
    %v860 = vpack.c.b16 %v772, %v771
    %v861 = vpack.c.b16 %v774, %v773
    %v862 = vpack.c.b16 %v776, %v775
    %v863 = vpack.c.b16 %v778, %v777
    %v864 = vpack.c.b16 %v780, %v779
    %v865 = vpack.c.b16 %v782, %v781
    %v866 = vpack.c.b16 %v784, %v783
    %v867 = vpack.c.b16 %v786, %v785
    %v868 = vpack.c.b16 %v788, %v787
    %v869 = vpack.c.b16 %v790, %v789
    %v870 = vpack.c.b16 %v792, %v791
    %v871 = vpack.c.b16 %v794, %v793
    %v872 = vpack.c.b16 %v796, %v795
    %v873 = vpack.c.b16 %v798, %v797
    %v874 = vpack.c.b16 %v800, %v799
    %v875 = vpack.c.b16 %v802, %v801
    %v876 = vpack.c.b16 %v804, %v803
    %v877 = vpack.c.b16 %v806, %v805
    %v878 = vpack.c.b16 %v808, %v807
    %v879 = vpack.c.b16 %v810, %v809
    %v880 = vpack.c.b16 %v812, %v811
    %v881 = vpack.c.b16 %v814, %v813
    %v882 = vpack.c.b16 %v816, %v815
    %v883 = vpack.c.b16 %v818, %v817
    %v884 = vpack.c.b16 %v820, %v819
    %v885 = vpack.c.b16 %v822, %v821
    %v886 = vpack.c.b16 %v824, %v823
    %v887 = vpack.c.b16 %v826, %v825
    %v888 = vpack.c.b16 %v828, %v827
    %v889 = vpack.c.b16 %v830, %v829
    %v890 = vpack.c.b16 %v832, %v831
    %v891 = vpack.c.b16 %v834, %v833
    %v892 = vpack.c.b16 %v836, %v835
    %v893 = vpack.c.b16 %v838, %v837
    %v894 = vpack.c.b16 %v840, %v839
    %v895 = vpack.c.b16 %v842, %v841
    %v896 = vpack.c.b16 %v844, %v843
    %v897 = vpack.c.b16 %v846, %v845
    %v898 = vpack.c.b16 %v848, %v847
    %v899 = vpack.c.b16 %v850, %v849
    %v900 = vpack.c.b16 %v852, %v851
    %949 = vmatpush.bf16.msra.mxu0 %v860
    %950 = vmatpush.bf16.msra.mxu0 %v859
    %951 = vmatpush.bf16.msra.mxu0 %v858
    %952 = vmatpush.bf16.msra.mxu0 %v857
    %953 = vmatpush.bf16.msra.mxu0 %v856
    %954 = vmatpush.bf16.msra.mxu0 %v855
    %955 = vmatpush.bf16.msra.mxu0 %v854
    %956 = vmatpush.bf16.msra.mxu0 %v853
    %957 = vmatmul.bf16.gmra.mxu0 %v84
    %v958 = vpop.f32.mrf.mxu0
    %v959 = vadd.f32 %v658, %v958
    %v960 = vpop.f32.mrf.mxu0
    %961 = vdwg.mxu0
    %962 = vmatpush.bf16.msra.mxu0 %v868
    %963 = vmatpush.bf16.msra.mxu0 %v867
    %964 = vmatpush.bf16.msra.mxu0 %v866
    %965 = vmatpush.bf16.msra.mxu0 %v865
    %966 = vmatpush.bf16.msra.mxu0 %v864
    %967 = vmatpush.bf16.msra.mxu0 %v863
    %968 = vmatpush.bf16.msra.mxu0 %v862
    %969 = vmatpush.bf16.msra.mxu0 %v861
    %970 = vmatmul.bf16.gmra.mxu0 %v85
    %v971 = vpop.f32.mrf.mxu0
    %v972 = vadd.f32 %v959, %v971
    %v973 = vpop.f32.mrf.mxu0
    %974 = vdwg.mxu0
    %975 = vmatpush.bf16.msra.mxu0 %v876
    %976 = vmatpush.bf16.msra.mxu0 %v875
    %977 = vmatpush.bf16.msra.mxu0 %v874
    %978 = vmatpush.bf16.msra.mxu0 %v873
    %979 = vmatpush.bf16.msra.mxu0 %v872
    %980 = vmatpush.bf16.msra.mxu0 %v871
    %981 = vmatpush.bf16.msra.mxu0 %v870
    %982 = vmatpush.bf16.msra.mxu0 %v869
    %983 = vmatmul.bf16.gmra.mxu0 %v86
    %v984 = vpop.f32.mrf.mxu0
    %v985 = vadd.f32 %v972, %v984
    %v986 = vpop.f32.mrf.mxu0
    %987 = vdwg.mxu0
    %988 = vmatpush.bf16.msra.mxu0 %v884
    %989 = vmatpush.bf16.msra.mxu0 %v883
    %990 = vmatpush.bf16.msra.mxu0 %v882
    %991 = vmatpush.bf16.msra.mxu0 %v881
    %992 = vmatpush.bf16.msra.mxu0 %v880
    %993 = vmatpush.bf16.msra.mxu0 %v879
    %994 = vmatpush.bf16.msra.mxu0 %v878
    %995 = vmatpush.bf16.msra.mxu0 %v877
    %996 = vmatmul.bf16.gmra.mxu0 %v87
    %v997 = vpop.f32.mrf.mxu0
    %v998 = vadd.f32 %v985, %v997
    %v999 = vpop.f32.mrf.mxu0
    %1000 = vdwg.mxu0
    %1001 = vmatpush.bf16.msra.mxu0 %v892
    %1002 = vmatpush.bf16.msra.mxu0 %v891
    %1003 = vmatpush.bf16.msra.mxu0 %v890
    %1004 = vmatpush.bf16.msra.mxu0 %v889
    %1005 = vmatpush.bf16.msra.mxu0 %v888
    %1006 = vmatpush.bf16.msra.mxu0 %v887
    %1007 = vmatpush.bf16.msra.mxu0 %v886
    %1008 = vmatpush.bf16.msra.mxu0 %v885
    %1009 = vmatmul.bf16.gmra.mxu0 %v88
    %v1010 = vpop.f32.mrf.mxu0
    %v1011 = vadd.f32 %v998, %v1010
    %v1012 = vpop.f32.mrf.mxu0
    %1013 = vdwg.mxu0
    %1014 = vmatpush.bf16.msra.mxu0 %v900
    %1015 = vmatpush.bf16.msra.mxu0 %v899
    %1016 = vmatpush.bf16.msra.mxu0 %v898
    %1017 = vmatpush.bf16.msra.mxu0 %v897
    %1018 = vmatpush.bf16.msra.mxu0 %v896
    %1019 = vmatpush.bf16.msra.mxu0 %v895
    %1020 = vmatpush.bf16.msra.mxu0 %v894
    %1021 = vmatpush.bf16.msra.mxu0 %v893
    %1022 = vmatmul.bf16.gmra.mxu0 %v89
    %v1023 = vpop.f32.mrf.mxu0
    %v1024 = vadd.f32 %v1011, %v1023
    %v1025 = vpop.f32.mrf.mxu0
    %1026 = vdwg.mxu0
    %v1027 = vld [vmem:[#allocation7] sm:$0xff]
    %v1028 = vld [vmem:[#allocation7 + $0x8] sm:$0xff]
    %v1029 = vld [vmem:[#allocation7 + $0x10] sm:$0xff]
    %v1030 = vld [vmem:[#allocation7 + $0x18] sm:$0xff]
    %v1031 = vld [vmem:[#allocation7 + $0x20] sm:$0xff]
    %v1032 = vld [vmem:[#allocation7 + $0x28] sm:$0xff]
    %v1033 = vpack.c.bf16 %v1027, %v1027
    %v1034 = vpack.c.bf16 %v1028, %v1028
    %v1035 = vpack.c.bf16 %v1029, %v1029
    %v1036 = vpack.c.bf16 %v1030, %v1030
    %v1037 = vpack.c.bf16 %v1031, %v1031
    %v1038 = vpack.c.bf16 %v1032, %v1032
    %s1039 = scalar_lea.vmem [#allocation8], 768
    %v1040 = vld [vmem:[%s1039] sm:$0xf]
    %v1041 = vld [vmem:[%s1039 + $0x4] sm:$0xf]
    %v1042 = vld [vmem:[%s1039 + $0x8] sm:$0xf]
    %v1043 = vld [vmem:[%s1039 + $0xc] sm:$0xf]
    %v1044 = vld [vmem:[%s1039 + $0x10] sm:$0xf]
    %v1045 = vld [vmem:[%s1039 + $0x14] sm:$0xf]
    %v1046 = vld [vmem:[%s1039 + $0x18] sm:$0xf]
    %v1047 = vld [vmem:[%s1039 + $0x1c] sm:$0xf]
    %v1048 = vld [vmem:[%s1039 + $0x20] sm:$0xf]
    %v1049 = vld [vmem:[%s1039 + $0x24] sm:$0xf]
    %v1050 = vld [vmem:[%s1039 + $0x28] sm:$0xf]
    %v1051 = vld [vmem:[%s1039 + $0x2c] sm:$0xf]
    %v1052 = vld [vmem:[%s1039 + $0x30] sm:$0xf]
    %v1053 = vld [vmem:[%s1039 + $0x34] sm:$0xf]
    %v1054 = vld [vmem:[%s1039 + $0x38] sm:$0xf]
    %v1055 = vld [vmem:[%s1039 + $0x3c] sm:$0xf]
    %v1056 = vld [vmem:[%s1039 + $0x40] sm:$0xf]
    %v1057 = vld [vmem:[%s1039 + $0x44] sm:$0xf]
    %v1058 = vld [vmem:[%s1039 + $0x48] sm:$0xf]
    %v1059 = vld [vmem:[%s1039 + $0x4c] sm:$0xf]
    %v1060 = vld [vmem:[%s1039 + $0x50] sm:$0xf]
    %v1061 = vld [vmem:[%s1039 + $0x54] sm:$0xf]
    %v1062 = vld [vmem:[%s1039 + $0x58] sm:$0xf]
    %v1063 = vld [vmem:[%s1039 + $0x5c] sm:$0xf]
    %v1064 = vld [vmem:[%s1039 + $0x60] sm:$0xf]
    %v1065 = vld [vmem:[%s1039 + $0x64] sm:$0xf]
    %v1066 = vld [vmem:[%s1039 + $0x68] sm:$0xf]
    %v1067 = vld [vmem:[%s1039 + $0x6c] sm:$0xf]
    %v1068 = vld [vmem:[%s1039 + $0x70] sm:$0xf]
    %v1069 = vld [vmem:[%s1039 + $0x74] sm:$0xf]
    %v1070 = vld [vmem:[%s1039 + $0x78] sm:$0xf]
    %v1071 = vld [vmem:[%s1039 + $0x7c] sm:$0xf]
    %v1072 = vld [vmem:[%s1039 + $0x80] sm:$0xf]
    %v1073 = vld [vmem:[%s1039 + $0x84] sm:$0xf]
    %v1074 = vld [vmem:[%s1039 + $0x88] sm:$0xf]
    %v1075 = vld [vmem:[%s1039 + $0x8c] sm:$0xf]
    %v1076 = vld [vmem:[%s1039 + $0x90] sm:$0xf]
    %v1077 = vld [vmem:[%s1039 + $0x94] sm:$0xf]
    %v1078 = vld [vmem:[%s1039 + $0x98] sm:$0xf]
    %v1079 = vld [vmem:[%s1039 + $0x9c] sm:$0xf]
    %v1080 = vld [vmem:[%s1039 + $0xa0] sm:$0xf]
    %v1081 = vld [vmem:[%s1039 + $0xa4] sm:$0xf]
    %v1082 = vld [vmem:[%s1039 + $0xa8] sm:$0xf]
    %v1083 = vld [vmem:[%s1039 + $0xac] sm:$0xf]
    %v1084 = vld [vmem:[%s1039 + $0xb0] sm:$0xf]
    %v1085 = vld [vmem:[%s1039 + $0xb4] sm:$0xf]
    %v1086 = vld [vmem:[%s1039 + $0xb8] sm:$0xf]
    %v1087 = vld [vmem:[%s1039 + $0xbc] sm:$0xf]
    %v1088 = vld [vmem:[%s1039 + $0xc0] sm:$0xf]
    %v1089 = vld [vmem:[%s1039 + $0xc4] sm:$0xf]
    %v1090 = vld [vmem:[%s1039 + $0xc8] sm:$0xf]
    %v1091 = vld [vmem:[%s1039 + $0xcc] sm:$0xf]
    %v1092 = vld [vmem:[%s1039 + $0xd0] sm:$0xf]
    %v1093 = vld [vmem:[%s1039 + $0xd4] sm:$0xf]
    %v1094 = vld [vmem:[%s1039 + $0xd8] sm:$0xf]
    %v1095 = vld [vmem:[%s1039 + $0xdc] sm:$0xf]
    %v1096 = vld [vmem:[%s1039 + $0xe0] sm:$0xf]
    %v1097 = vld [vmem:[%s1039 + $0xe4] sm:$0xf]
    %v1098 = vld [vmem:[%s1039 + $0xe8] sm:$0xf]
    %v1099 = vld [vmem:[%s1039 + $0xec] sm:$0xf]
    %v1100 = vld [vmem:[%s1039 + $0xf0] sm:$0xf]
    %v1101 = vld [vmem:[%s1039 + $0xf4] sm:$0xf]
    %v1102 = vld [vmem:[%s1039 + $0xf8] sm:$0xf]
    %v1103 = vld [vmem:[%s1039 + $0xfc] sm:$0xf]
    %v1104 = vld [vmem:[%s1039 + $0x100] sm:$0xf]
    %v1105 = vld [vmem:[%s1039 + $0x104] sm:$0xf]
    %v1106 = vld [vmem:[%s1039 + $0x108] sm:$0xf]
    %v1107 = vld [vmem:[%s1039 + $0x10c] sm:$0xf]
    %v1108 = vld [vmem:[%s1039 + $0x110] sm:$0xf]
    %v1109 = vld [vmem:[%s1039 + $0x114] sm:$0xf]
    %v1110 = vld [vmem:[%s1039 + $0x118] sm:$0xf]
    %v1111 = vld [vmem:[%s1039 + $0x11c] sm:$0xf]
    %v1112 = vld [vmem:[%s1039 + $0x120] sm:$0xf]
    %v1113 = vld [vmem:[%s1039 + $0x124] sm:$0xf]
    %v1114 = vld [vmem:[%s1039 + $0x128] sm:$0xf]
    %v1115 = vld [vmem:[%s1039 + $0x12c] sm:$0xf]
    %v1116 = vld [vmem:[%s1039 + $0x130] sm:$0xf]
    %v1117 = vld [vmem:[%s1039 + $0x134] sm:$0xf]
    %v1118 = vld [vmem:[%s1039 + $0x138] sm:$0xf]
    %v1119 = vld [vmem:[%s1039 + $0x13c] sm:$0xf]
    %v1120 = vld [vmem:[%s1039 + $0x140] sm:$0xf]
    %v1121 = vld [vmem:[%s1039 + $0x144] sm:$0xf]
    %v1122 = vld [vmem:[%s1039 + $0x148] sm:$0xf]
    %v1123 = vld [vmem:[%s1039 + $0x14c] sm:$0xf]
    %v1124 = vld [vmem:[%s1039 + $0x150] sm:$0xf]
    %v1125 = vld [vmem:[%s1039 + $0x154] sm:$0xf]
    %v1126 = vld [vmem:[%s1039 + $0x158] sm:$0xf]
    %v1127 = vld [vmem:[%s1039 + $0x15c] sm:$0xf]
    %v1128 = vld [vmem:[%s1039 + $0x160] sm:$0xf]
    %v1129 = vld [vmem:[%s1039 + $0x164] sm:$0xf]
    %v1130 = vld [vmem:[%s1039 + $0x168] sm:$0xf]
    %v1131 = vld [vmem:[%s1039 + $0x16c] sm:$0xf]
    %v1132 = vld [vmem:[%s1039 + $0x170] sm:$0xf]
    %v1133 = vld [vmem:[%s1039 + $0x174] sm:$0xf]
    %v1134 = vld [vmem:[%s1039 + $0x178] sm:$0xf]
    %v1135 = vld [vmem:[%s1039 + $0x17c] sm:$0xf]
    %v1232 = vunpack.c.l.b16 %v1040
    %v1233 = vunpack.c.l.b16 %v1041
    %v1234 = vunpack.c.l.b16 %v1042
    %v1235 = vunpack.c.l.b16 %v1043
    %v1236 = vunpack.c.l.b16 %v1044
    %v1237 = vunpack.c.l.b16 %v1045
    %v1238 = vunpack.c.l.b16 %v1046
    %v1239 = vunpack.c.l.b16 %v1047
    %v1240 = vunpack.c.l.b16 %v1048
    %v1241 = vunpack.c.l.b16 %v1049
    %v1242 = vunpack.c.l.b16 %v1050
    %v1243 = vunpack.c.l.b16 %v1051
    %v1244 = vunpack.c.l.b16 %v1052
    %v1245 = vunpack.c.l.b16 %v1053
    %v1246 = vunpack.c.l.b16 %v1054
    %v1247 = vunpack.c.l.b16 %v1055
    %v1248 = vunpack.c.l.b16 %v1056
    %v1249 = vunpack.c.l.b16 %v1057
    %v1250 = vunpack.c.l.b16 %v1058
    %v1251 = vunpack.c.l.b16 %v1059
    %v1252 = vunpack.c.l.b16 %v1060
    %v1253 = vunpack.c.l.b16 %v1061
    %v1254 = vunpack.c.l.b16 %v1062
    %v1255 = vunpack.c.l.b16 %v1063
    %v1256 = vunpack.c.l.b16 %v1064
    %v1257 = vunpack.c.l.b16 %v1065
    %v1258 = vunpack.c.l.b16 %v1066
    %v1259 = vunpack.c.l.b16 %v1067
    %v1260 = vunpack.c.l.b16 %v1068
    %v1261 = vunpack.c.l.b16 %v1069
    %v1262 = vunpack.c.l.b16 %v1070
    %v1263 = vunpack.c.l.b16 %v1071
    %v1264 = vunpack.c.l.b16 %v1072
    %v1265 = vunpack.c.l.b16 %v1073
    %v1266 = vunpack.c.l.b16 %v1074
    %v1267 = vunpack.c.l.b16 %v1075
    %v1268 = vunpack.c.l.b16 %v1076
    %v1269 = vunpack.c.l.b16 %v1077
    %v1270 = vunpack.c.l.b16 %v1078
    %v1271 = vunpack.c.l.b16 %v1079
    %v1272 = vunpack.c.l.b16 %v1080
    %v1273 = vunpack.c.l.b16 %v1081
    %v1274 = vunpack.c.l.b16 %v1082
    %v1275 = vunpack.c.l.b16 %v1083
    %v1276 = vunpack.c.l.b16 %v1084
    %v1277 = vunpack.c.l.b16 %v1085
    %v1278 = vunpack.c.l.b16 %v1086
    %v1279 = vunpack.c.l.b16 %v1087
    %v1280 = vunpack.c.l.b16 %v1088
    %v1281 = vunpack.c.l.b16 %v1089
    %v1282 = vunpack.c.l.b16 %v1090
    %v1283 = vunpack.c.l.b16 %v1091
    %v1284 = vunpack.c.l.b16 %v1092
    %v1285 = vunpack.c.l.b16 %v1093
    %v1286 = vunpack.c.l.b16 %v1094
    %v1287 = vunpack.c.l.b16 %v1095
    %v1288 = vunpack.c.l.b16 %v1096
    %v1289 = vunpack.c.l.b16 %v1097
    %v1290 = vunpack.c.l.b16 %v1098
    %v1291 = vunpack.c.l.b16 %v1099
    %v1292 = vunpack.c.l.b16 %v1100
    %v1293 = vunpack.c.l.b16 %v1101
    %v1294 = vunpack.c.l.b16 %v1102
    %v1295 = vunpack.c.l.b16 %v1103
    %v1296 = vunpack.c.l.b16 %v1104
    %v1297 = vunpack.c.l.b16 %v1105
    %v1298 = vunpack.c.l.b16 %v1106
    %v1299 = vunpack.c.l.b16 %v1107
    %v1300 = vunpack.c.l.b16 %v1108
    %v1301 = vunpack.c.l.b16 %v1109
    %v1302 = vunpack.c.l.b16 %v1110
    %v1303 = vunpack.c.l.b16 %v1111
    %v1304 = vunpack.c.l.b16 %v1112
    %v1305 = vunpack.c.l.b16 %v1113
    %v1306 = vunpack.c.l.b16 %v1114
    %v1307 = vunpack.c.l.b16 %v1115
    %v1308 = vunpack.c.l.b16 %v1116
    %v1309 = vunpack.c.l.b16 %v1117
    %v1310 = vunpack.c.l.b16 %v1118
    %v1311 = vunpack.c.l.b16 %v1119
    %v1312 = vunpack.c.l.b16 %v1120
    %v1313 = vunpack.c.l.b16 %v1121
    %v1314 = vunpack.c.l.b16 %v1122
    %v1315 = vunpack.c.l.b16 %v1123
    %v1316 = vunpack.c.l.b16 %v1124
    %v1317 = vunpack.c.l.b16 %v1125
    %v1318 = vunpack.c.l.b16 %v1126
    %v1319 = vunpack.c.l.b16 %v1127
    %v1320 = vunpack.c.l.b16 %v1128
    %v1321 = vunpack.c.l.b16 %v1129
    %v1322 = vunpack.c.l.b16 %v1130
    %v1323 = vunpack.c.l.b16 %v1131
    %v1324 = vunpack.c.l.b16 %v1132
    %v1325 = vunpack.c.l.b16 %v1133
    %v1326 = vunpack.c.l.b16 %v1134
    %v1327 = vunpack.c.l.b16 %v1135
    %v1328 = vpack.c.b16 %v1233, %v1232
    %v1329 = vpack.c.b16 %v1235, %v1234
    %v1330 = vpack.c.b16 %v1237, %v1236
    %v1331 = vpack.c.b16 %v1239, %v1238
    %v1332 = vpack.c.b16 %v1241, %v1240
    %v1333 = vpack.c.b16 %v1243, %v1242
    %v1334 = vpack.c.b16 %v1245, %v1244
    %v1335 = vpack.c.b16 %v1247, %v1246
    %v1336 = vpack.c.b16 %v1249, %v1248
    %v1337 = vpack.c.b16 %v1251, %v1250
    %v1338 = vpack.c.b16 %v1253, %v1252
    %v1339 = vpack.c.b16 %v1255, %v1254
    %v1340 = vpack.c.b16 %v1257, %v1256
    %v1341 = vpack.c.b16 %v1259, %v1258
    %v1342 = vpack.c.b16 %v1261, %v1260
    %v1343 = vpack.c.b16 %v1263, %v1262
    %v1344 = vpack.c.b16 %v1265, %v1264
    %v1345 = vpack.c.b16 %v1267, %v1266
    %v1346 = vpack.c.b16 %v1269, %v1268
    %v1347 = vpack.c.b16 %v1271, %v1270
    %v1348 = vpack.c.b16 %v1273, %v1272
    %v1349 = vpack.c.b16 %v1275, %v1274
    %v1350 = vpack.c.b16 %v1277, %v1276
    %v1351 = vpack.c.b16 %v1279, %v1278
    %v1352 = vpack.c.b16 %v1281, %v1280
    %v1353 = vpack.c.b16 %v1283, %v1282
    %v1354 = vpack.c.b16 %v1285, %v1284
    %v1355 = vpack.c.b16 %v1287, %v1286
    %v1356 = vpack.c.b16 %v1289, %v1288
    %v1357 = vpack.c.b16 %v1291, %v1290
    %v1358 = vpack.c.b16 %v1293, %v1292
    %v1359 = vpack.c.b16 %v1295, %v1294
    %v1360 = vpack.c.b16 %v1297, %v1296
    %v1361 = vpack.c.b16 %v1299, %v1298
    %v1362 = vpack.c.b16 %v1301, %v1300
    %v1363 = vpack.c.b16 %v1303, %v1302
    %v1364 = vpack.c.b16 %v1305, %v1304
    %v1365 = vpack.c.b16 %v1307, %v1306
    %v1366 = vpack.c.b16 %v1309, %v1308
    %v1367 = vpack.c.b16 %v1311, %v1310
    %v1368 = vpack.c.b16 %v1313, %v1312
    %v1369 = vpack.c.b16 %v1315, %v1314
    %v1370 = vpack.c.b16 %v1317, %v1316
    %v1371 = vpack.c.b16 %v1319, %v1318
    %v1372 = vpack.c.b16 %v1321, %v1320
    %v1373 = vpack.c.b16 %v1323, %v1322
    %v1374 = vpack.c.b16 %v1325, %v1324
    %v1375 = vpack.c.b16 %v1327, %v1326
    %1424 = vmatpush.bf16.msra.mxu0 %v1335
    %1425 = vmatpush.bf16.msra.mxu0 %v1334
    %1426 = vmatpush.bf16.msra.mxu0 %v1333
    %1427 = vmatpush.bf16.msra.mxu0 %v1332
    %1428 = vmatpush.bf16.msra.mxu0 %v1331
    %1429 = vmatpush.bf16.msra.mxu0 %v1330
    %1430 = vmatpush.bf16.msra.mxu0 %v1329
    %1431 = vmatpush.bf16.msra.mxu0 %v1328
    %1432 = vmatmul.bf16.gmra.mxu0 %v1033
    %v1433 = vpop.f32.mrf.mxu0
    %v1434 = vadd.f32 0.0, %v1433
    %v1435 = vpop.f32.mrf.mxu0
    %1436 = vdwg.mxu0
    %1437 = vmatpush.bf16.msra.mxu0 %v1343
    %1438 = vmatpush.bf16.msra.mxu0 %v1342
    %1439 = vmatpush.bf16.msra.mxu0 %v1341
    %1440 = vmatpush.bf16.msra.mxu0 %v1340
    %1441 = vmatpush.bf16.msra.mxu0 %v1339
    %1442 = vmatpush.bf16.msra.mxu0 %v1338
    %1443 = vmatpush.bf16.msra.mxu0 %v1337
    %1444 = vmatpush.bf16.msra.mxu0 %v1336
    %1445 = vmatmul.bf16.gmra.mxu0 %v1034
    %v1446 = vpop.f32.mrf.mxu0
    %v1447 = vadd.f32 %v1434, %v1446
    %v1448 = vpop.f32.mrf.mxu0
    %1449 = vdwg.mxu0
    %1450 = vmatpush.bf16.msra.mxu0 %v1351
    %1451 = vmatpush.bf16.msra.mxu0 %v1350
    %1452 = vmatpush.bf16.msra.mxu0 %v1349
    %1453 = vmatpush.bf16.msra.mxu0 %v1348
    %1454 = vmatpush.bf16.msra.mxu0 %v1347
    %1455 = vmatpush.bf16.msra.mxu0 %v1346
    %1456 = vmatpush.bf16.msra.mxu0 %v1345
    %1457 = vmatpush.bf16.msra.mxu0 %v1344
    %1458 = vmatmul.bf16.gmra.mxu0 %v1035
    %v1459 = vpop.f32.mrf.mxu0
    %v1460 = vadd.f32 %v1447, %v1459
    %v1461 = vpop.f32.mrf.mxu0
    %1462 = vdwg.mxu0
    %1463 = vmatpush.bf16.msra.mxu0 %v1359
    %1464 = vmatpush.bf16.msra.mxu0 %v1358
    %1465 = vmatpush.bf16.msra.mxu0 %v1357
    %1466 = vmatpush.bf16.msra.mxu0 %v1356
    %1467 = vmatpush.bf16.msra.mxu0 %v1355
    %1468 = vmatpush.bf16.msra.mxu0 %v1354
    %1469 = vmatpush.bf16.msra.mxu0 %v1353
    %1470 = vmatpush.bf16.msra.mxu0 %v1352
    %1471 = vmatmul.bf16.gmra.mxu0 %v1036
    %v1472 = vpop.f32.mrf.mxu0
    %v1473 = vadd.f32 %v1460, %v1472
    %v1474 = vpop.f32.mrf.mxu0
    %1475 = vdwg.mxu0
    %1476 = vmatpush.bf16.msra.mxu0 %v1367
    %1477 = vmatpush.bf16.msra.mxu0 %v1366
    %1478 = vmatpush.bf16.msra.mxu0 %v1365
    %1479 = vmatpush.bf16.msra.mxu0 %v1364
    %1480 = vmatpush.bf16.msra.mxu0 %v1363
    %1481 = vmatpush.bf16.msra.mxu0 %v1362
    %1482 = vmatpush.bf16.msra.mxu0 %v1361
    %1483 = vmatpush.bf16.msra.mxu0 %v1360
    %1484 = vmatmul.bf16.gmra.mxu0 %v1037
    %v1485 = vpop.f32.mrf.mxu0
    %v1486 = vadd.f32 %v1473, %v1485
    %v1487 = vpop.f32.mrf.mxu0
    %1488 = vdwg.mxu0
    %1489 = vmatpush.bf16.msra.mxu0 %v1375
    %1490 = vmatpush.bf16.msra.mxu0 %v1374
    %1491 = vmatpush.bf16.msra.mxu0 %v1373
    %1492 = vmatpush.bf16.msra.mxu0 %v1372
    %1493 = vmatpush.bf16.msra.mxu0 %v1371
    %1494 = vmatpush.bf16.msra.mxu0 %v1370
    %1495 = vmatpush.bf16.msra.mxu0 %v1369
    %1496 = vmatpush.bf16.msra.mxu0 %v1368
    %1497 = vmatmul.bf16.gmra.mxu0 %v1038
    %v1498 = vpop.f32.mrf.mxu0
    %v1499 = vadd.f32 %v1486, %v1498
    %v1500 = vpop.f32.mrf.mxu0
    %1501 = vdwg.mxu0
    %v1502 = vadd.f32 %v1024, %v1499
    %v1503 = vld [vmem:[%s4] sm:$0x1]
    %v1505 = vperm.slane %v1503, 0
    %v1507 = vadd.f32 %v1502, %v1505
    %1508 = vst [vmem:[#allocation10] sm:$0xff] %v1507
    // Predicated region
    $region38: #{tpu_custom_call.1} parent=1 // pred_check
      _
    $region39: #{tpu_custom_call.1} parent=1 // pred_check_branch
      %1510 = sbr.rel (0) target = $region41
    $region40: #{tpu_custom_call.1} parent=1 // pred_region
      %1512 = vsyncadd [#allocation4], 0
      %s1514 = sshll.u32 [#allocation10], 4
      %s1515 = int_to_ptr.vmem [resolvable:$true] %s1514
      %s1516 = sshll.u32 %s5, 4
      %s1517 = int_to_ptr.hbm [resolvable:$true] %s1516
      %1519 = dma.vmem_to_hbm [thread:$0]  %s1515, 128, %s1517, [#allocation4]
    $region41: #{tpu_custom_call.1} parent=1 // pred_fallthru
      _
    // Predicated region
    $region42: #{tpu_custom_call.1} parent=1 // pred_check
      _
    $region43: #{tpu_custom_call.1} parent=1 // pred_check_branch
      %1521 = sbr.rel (0) target = $region45
    $region44: #{tpu_custom_call.1} parent=1 // pred_region
      %1523 = dma.done [#allocation4], 128
    $region45: #{tpu_custom_call.1} parent=1 // pred_fallthru
      _
    %1524 = vsyncpa [#allocation3], 1
    %1525 = vsyncpa [#allocation6], 1
    %1526 = vsyncpa [#allocation9], 1
    %1527 = vsyncpa [#allocation4], 1

</llo_original>
